<compile_context>
chip_gen: v7x
topology: tpu7x:2x2x1
jax: 0.10.0
libtpu: 0.0.40
codegen_flags: <defaults>
</compile_context>

<pallas_src>
import functools

import jax
import jax.numpy as jnp
from jax.experimental import pallas as pl
from jax.experimental.pallas import tpu as pltpu


def _icm_kernel(s_ref, ns_ref, wfe_ref, bfe_ref, wfm_ref, bfm_ref, r_ref,
                *, inv_feat_dim):
    # s/ns: (TB, Dp)   wfe: (Dp, Hp)  bfe: (1, Hp)
    # wfm:  (Hp, Dp)   bfm: (1, Dp)   r:   (TB, 1)
    s = s_ref[...]
    ns = ns_ref[...]
    wfe = wfe_ref[...]
    bfe = bfe_ref[...]

    # Shared-weight feature extractor for state and next_state (MXU, f32 acc).
    s_feat = jnp.maximum(
        jnp.dot(s, wfe, preferred_element_type=jnp.float32) + bfe, 0.0)
    ns_feat = jnp.maximum(
        jnp.dot(ns, wfe, preferred_element_type=jnp.float32) + bfe, 0.0)

    # Forward model prediction.
    pred = jnp.dot(s_feat.astype(wfm_ref.dtype), wfm_ref[...],
                   preferred_element_type=jnp.float32) + bfm_ref[...]

    diff = pred - ns_feat
    # Padded lanes contribute exactly 0; divide by the real feature count.
    mse = jnp.sum(diff * diff, axis=-1, keepdims=True) * inv_feat_dim
    r_ref[...] = mse.astype(r_ref.dtype)


def _round_up(x, m):
    return pl.cdiv(x, m) * m


@functools.partial(jax.jit, static_argnames=("tb",))
def icm_forward(state, next_state, w_fe, b_fe, w_fm, b_fm, *, tb=256):
    """Fused ICM forward.  Returns per-row intrinsic reward, shape (B,)."""
    B, D = state.shape
    Din, H = w_fe.shape
    H2, Dout = w_fm.shape
    assert Din == D and H2 == H and Dout == D
    # The reference module's elementwise mse_loss requires hidden_dim == input_dim.
    assert H == D, "ICM's mse_loss needs hidden_dim == input_dim"

    Dp = _round_up(D, 128)          # lane-dense feature dims
    Hp = _round_up(H, 128)
    TB = min(tb, _round_up(B, 8))   # batch tile (multiple of 8 sublanes)
    Bp = _round_up(B, TB)

    # Zero-pad everything; padding is numerically inert (see module docstring).
    state_p = jnp.zeros((Bp, Dp), state.dtype).at[:B, :D].set(state)
    next_state_p = jnp.zeros((Bp, Dp), next_state.dtype).at[:B, :D].set(next_state)
    w_fe_p = jnp.zeros((Dp, Hp), w_fe.dtype).at[:D, :H].set(w_fe)
    b_fe_p = jnp.zeros((1, Hp), b_fe.dtype).at[0, :H].set(b_fe)
    w_fm_p = jnp.zeros((Hp, Dp), w_fm.dtype).at[:H, :D].set(w_fm)
    b_fm_p = jnp.zeros((1, Dp), b_fm.dtype).at[0, :D].set(b_fm)

    kernel = functools.partial(_icm_kernel, inv_feat_dim=1.0 / float(D))

    out = pl.pallas_call(
        kernel,
        out_shape=jax.ShapeDtypeStruct((Bp, 1), jnp.float32),
        grid=(Bp // TB,),
        in_specs=[
            pl.BlockSpec((TB, Dp), lambda i: (i, 0)),   # state tile
            pl.BlockSpec((TB, Dp), lambda i: (i, 0)),   # next_state tile
            pl.BlockSpec((Dp, Hp), lambda i: (0, 0)),   # W_fe   (VMEM-resident)
            pl.BlockSpec((1, Hp), lambda i: (0, 0)),    # b_fe   (VMEM-resident)
            pl.BlockSpec((Hp, Dp), lambda i: (0, 0)),   # W_fm   (VMEM-resident)
            pl.BlockSpec((1, Dp), lambda i: (0, 0)),    # b_fm   (VMEM-resident)
        ],
        out_specs=pl.BlockSpec((TB, 1), lambda i: (i, 0)),
        compiler_params=pltpu.CompilerParams(
            dimension_semantics=("parallel",)),
    )(state_p, next_state_p, w_fe_p, b_fe_p, w_fm_p, b_fm_p)

    return out[:B, 0]


def init_icm_params(key, input_dim, hidden_dim, dtype=jnp.float32):
    """Mirror nn.Linear's U(-1/sqrt(fan_in), 1/sqrt(fan_in)) init.

    Weights are returned pre-transposed to (in_features, out_features).
    """
    k1, k2, k3, k4 = jax.random.split(key, 4)
    bound_fe = 1.0 / jnp.sqrt(jnp.array(input_dim, dtype))
    bound_fm = 1.0 / jnp.sqrt(jnp.array(hidden_dim, dtype))
    w_fe = jax.random.uniform(k1, (input_dim, hidden_dim), dtype,
                              minval=-bound_fe, maxval=bound_fe)
    b_fe = jax.random.uniform(k2, (hidden_dim,), dtype,
                              minval=-bound_fe, maxval=bound_fe)
    w_fm = jax.random.uniform(k3, (hidden_dim, input_dim), dtype,
                              minval=-bound_fm, maxval=bound_fm)
    b_fm = jax.random.uniform(k4, (input_dim,), dtype,
                              minval=-bound_fm, maxval=bound_fm)
    return w_fe, b_fe, w_fm, b_fm


def _reference_forward(state, next_state, w_fe, b_fe, w_fm, b_fm):
    s_feat = jnp.maximum(state @ w_fe + b_fe, 0.0)
    ns_feat = jnp.maximum(next_state @ w_fe + b_fe, 0.0)
    pred = s_feat @ w_fm + b_fm
    return jnp.mean((pred - ns_feat) ** 2, axis=-1)


if __name__ == "__main__":
    key = jax.random.PRNGKey(0)
    k_s, k_ns, k_p = jax.random.split(key, 3)

    batch = 300        # deliberately NOT a multiple of the batch tile
    input_dim = 32     # state dimension
    hidden_dim = 32    # must equal input_dim (required by the module's mse_loss)

    state = jax.random.normal(k_s, (batch, input_dim), jnp.float32)
    next_state = jax.random.normal(k_ns, (batch, input_dim), jnp.float32)
    w_fe, b_fe, w_fm, b_fm = init_icm_params(k_p, input_dim, hidden_dim)

    # tb=128 -> padded batch 384, grid of 3 tiles (exercises the batch grid).
    reward = icm_forward(state, next_state, w_fe, b_fe, w_fm, b_fm, tb=128)
    reward = jax.block_until_ready(reward)

    ref = _reference_forward(state, next_state, w_fe, b_fe, w_fm, b_fm)
    assert reward.shape == (batch,)
    assert jnp.allclose(reward, ref, atol=1e-4, rtol=1e-4), "mismatch vs reference"

    print("KERNEL_OK")
</pallas_src>

<mosaic_0001>
module attributes {stable_mosaic.version = 11 : i64} {
  func.func @_icm_kernel(%arg0: i32, %arg1: memref<128x128xf32, #tpu.memory_space<vmem>>, %arg2: memref<128x128xf32, #tpu.memory_space<vmem>>, %arg3: memref<128x128xf32, #tpu.memory_space<vmem>>, %arg4: memref<1x128xf32, #tpu.memory_space<vmem>>, %arg5: memref<128x128xf32, #tpu.memory_space<vmem>>, %arg6: memref<1x128xf32, #tpu.memory_space<vmem>>, %arg7: memref<128x1xf32, #tpu.memory_space<vmem>>) attributes {dimension_semantics = [#tpu.dimension_semantics<parallel>], iteration_bounds = array<i64: 3>, scalar_prefetch = 0 : i64, scratch_operands = 0 : i64, tpu.core_type = #tpu.core_type<tc>, window_params = [{transform_indices = @transform_0, window_bounds = array<i64: 128, 128>}, {transform_indices = @transform_1, window_bounds = array<i64: 128, 128>}, {pipeline_mode = #tpu.pipeline_mode<synchronous>, transform_indices = @transform_2, window_bounds = array<i64: 128, 128>}, {pipeline_mode = #tpu.pipeline_mode<synchronous>, transform_indices = @transform_3, window_bounds = array<i64: 1, 128>}, {pipeline_mode = #tpu.pipeline_mode<synchronous>, transform_indices = @transform_4, window_bounds = array<i64: 128, 128>}, {pipeline_mode = #tpu.pipeline_mode<synchronous>, transform_indices = @transform_5, window_bounds = array<i64: 1, 128>}, {transform_indices = @transform_6, window_bounds = array<i64: 128, 1>}]} {
    %c0 = arith.constant 0 : index
    %c0_0 = arith.constant 0 : index
    %0 = vector.load %arg1[%c0, %c0_0] : memref<128x128xf32, #tpu.memory_space<vmem>>, vector<128x128xf32>
    %c0_1 = arith.constant 0 : index
    %c0_2 = arith.constant 0 : index
    %1 = vector.load %arg2[%c0_1, %c0_2] : memref<128x128xf32, #tpu.memory_space<vmem>>, vector<128x128xf32>
    %c0_3 = arith.constant 0 : index
    %c0_4 = arith.constant 0 : index
    %2 = vector.load %arg3[%c0_3, %c0_4] : memref<128x128xf32, #tpu.memory_space<vmem>>, vector<128x128xf32>
    %c0_5 = arith.constant 0 : index
    %c0_6 = arith.constant 0 : index
    %3 = vector.load %arg4[%c0_5, %c0_6] : memref<1x128xf32, #tpu.memory_space<vmem>>, vector<1x128xf32>
    %cst = arith.constant dense<0.000000e+00> : vector<128x128xf32>
    %4 = tpu.matmul %0, %2, %cst {dimension_numbers = #tpu.dot_dimension_numbers<[1], [0], [0], [1], [0, 0, 1, 1], [], []>} : vector<128x128xf32>, vector<128x128xf32>, vector<128x128xf32> -> vector<128x128xf32>
    %5 = vector.broadcast %3 : vector<1x128xf32> to vector<128x128xf32>
    %6 = arith.addf %4, %5 : vector<128x128xf32>
    %cst_7 = arith.constant 0.000000e+00 : f32
    %7 = vector.broadcast %cst_7 : f32 to vector<128x128xf32>
    %8 = arith.maximumf %6, %7 : vector<128x128xf32>
    %cst_8 = arith.constant dense<0.000000e+00> : vector<128x128xf32>
    %9 = tpu.matmul %1, %2, %cst_8 {dimension_numbers = #tpu.dot_dimension_numbers<[1], [0], [0], [1], [0, 0, 1, 1], [], []>} : vector<128x128xf32>, vector<128x128xf32>, vector<128x128xf32> -> vector<128x128xf32>
    %10 = vector.broadcast %3 : vector<1x128xf32> to vector<128x128xf32>
    %11 = arith.addf %9, %10 : vector<128x128xf32>
    %cst_9 = arith.constant 0.000000e+00 : f32
    %12 = vector.broadcast %cst_9 : f32 to vector<128x128xf32>
    %13 = arith.maximumf %11, %12 : vector<128x128xf32>
    %c0_10 = arith.constant 0 : index
    %c0_11 = arith.constant 0 : index
    %14 = vector.load %arg5[%c0_10, %c0_11] : memref<128x128xf32, #tpu.memory_space<vmem>>, vector<128x128xf32>
    %cst_12 = arith.constant dense<0.000000e+00> : vector<128x128xf32>
    %15 = tpu.matmul %8, %14, %cst_12 {dimension_numbers = #tpu.dot_dimension_numbers<[1], [0], [0], [1], [0, 0, 1, 1], [], []>} : vector<128x128xf32>, vector<128x128xf32>, vector<128x128xf32> -> vector<128x128xf32>
    %c0_13 = arith.constant 0 : index
    %c0_14 = arith.constant 0 : index
    %16 = vector.load %arg6[%c0_13, %c0_14] : memref<1x128xf32, #tpu.memory_space<vmem>>, vector<1x128xf32>
    %17 = vector.broadcast %16 : vector<1x128xf32> to vector<128x128xf32>
    %18 = arith.addf %15, %17 : vector<128x128xf32>
    %19 = arith.subf %18, %13 : vector<128x128xf32>
    %20 = arith.mulf %19, %19 : vector<128x128xf32>
    %cst_15 = arith.constant dense<0.000000e+00> : vector<128xf32>
    %21 = vector.multi_reduction <add>, %20, %cst_15 [1] : vector<128x128xf32> to vector<128xf32>
    %22 = vector.shape_cast %21 : vector<128xf32> to vector<128x1xf32>
    %cst_16 = arith.constant 3.125000e-02 : f32
    %23 = vector.broadcast %cst_16 : f32 to vector<128x1xf32>
    %24 = arith.mulf %22, %23 : vector<128x1xf32>
    %c0_17 = arith.constant 0 : index
    %c0_18 = arith.constant 0 : index
    %25 = vector.load %arg7[%c0_17, %c0_18] : memref<128x1xf32, #tpu.memory_space<vmem>>, vector<128x1xf32>
    tpu.vector_store %arg7[%c0_17, %c0_18], %24 {strides = array<i32>} : memref<128x1xf32, #tpu.memory_space<vmem>>, vector<128x1xf32>,
    return
  }
  func.func @transform_0(%arg0: i32) -> (i32, i32) {
    %c0_i32 = arith.constant 0 : i32
    %c0_i32_0 = arith.constant 0 : i32
    return %arg0, %c0_i32 : i32, i32
  }
  func.func @transform_1(%arg0: i32) -> (i32, i32) {
    %c0_i32 = arith.constant 0 : i32
    %c0_i32_0 = arith.constant 0 : i32
    return %arg0, %c0_i32 : i32, i32
  }
  func.func @transform_2(%arg0: i32) -> (i32, i32) {
    %c0_i32 = arith.constant 0 : i32
    %c0_i32_0 = arith.constant 0 : i32
    %c0_i32_1 = arith.constant 0 : i32
    return %c0_i32, %c0_i32_0 : i32, i32
  }
  func.func @transform_3(%arg0: i32) -> (i32, i32) {
    %c0_i32 = arith.constant 0 : i32
    %c0_i32_0 = arith.constant 0 : i32
    %c0_i32_1 = arith.constant 0 : i32
    return %c0_i32, %c0_i32_0 : i32, i32
  }
  func.func @transform_4(%arg0: i32) -> (i32, i32) {
    %c0_i32 = arith.constant 0 : i32
    %c0_i32_0 = arith.constant 0 : i32
    %c0_i32_1 = arith.constant 0 : i32
    return %c0_i32, %c0_i32_0 : i32, i32
  }
  func.func @transform_5(%arg0: i32) -> (i32, i32) {
    %c0_i32 = arith.constant 0 : i32
    %c0_i32_0 = arith.constant 0 : i32
    %c0_i32_1 = arith.constant 0 : i32
    return %c0_i32, %c0_i32_0 : i32, i32
  }
  func.func @transform_6(%arg0: i32) -> (i32, i32) {
    %c0_i32 = arith.constant 0 : i32
    %c0_i32_0 = arith.constant 0 : i32
    return %arg0, %c0_i32 : i32, i32
  }
}

</mosaic_0001>

<llo_original>
// kernel: icm_forward.1
$region0: #{icm_forward.1}
  #allocation0 [shape = 'u32[]', space=smem, size = 0x4, offset = 0x4, fixed_abs, tag = 'smem constant byte address 0x4 - core index']
  #allocation1 [shape = 'u32[144,128]{1,0:T(1,128)}', space=vmem, size = 0x12000, scoped, tag = 'internal scratch']
  %s0 = inlined_call_operand.vmem [shape: f32[384,128], index: 0, kind: input, shape index: {}]
  %s1 = inlined_call_operand.vmem [shape: f32[384,128], index: 1, kind: input, shape index: {}]
  %s2 = inlined_call_operand.vmem [shape: f32[128,128], index: 2, kind: input, shape index: {}]
  %s3 = inlined_call_operand.vmem [shape: f32[1,128], index: 3, kind: input, shape index: {}]
  %s4 = inlined_call_operand.vmem [shape: f32[128,128], index: 4, kind: input, shape index: {}]
  %s5 = inlined_call_operand.vmem [shape: f32[1,128], index: 5, kind: input, shape index: {}]
  %s6 = inlined_call_operand.vmem [shape: f32[384,1], index: 6, kind: output, shape index: {}]
  %s7 = sld [smem:[#allocation0]]
  $region57: #{icm_forward.1} parent=0
    _
  %s9 = ssub.s32 1, %s7
  %s10 = scalar_select 0, %s9, %s7
  loop: start=0, step=1, limit=5
  $region2: #{icm_forward.1} parent=0 // loop_pre_header
    _
  $region3: #{icm_forward.1} parent=0 // loop_header
    %s12 = sphi 0, %s16
    %p13 = scmp.ge.s32.totalorder %s12, 5
    %s22 = sphi 0, %s24
    %s25 = sphi 0, %s22
    %s26 = sphi 0, %s25
    %s42 = sphi 0, %s26
    %s48 = sphi 0, %s50
    %s51 = sphi 0, %s48
    %s52 = sphi 0, %s51
    %s68 = sphi 0, %s52
    %s72 = sphi 0, %s72
    %s74 = sphi 0, %s72
    %s75 = sphi 0, %s74
    %s89 = sphi 0, %s75
    %s93 = sphi 0, %s93
    %s95 = sphi 0, %s93
    %s96 = sphi 0, %s95
    %s110 = sphi 0, %s96
    %s114 = sphi 0, %s114
    %s116 = sphi 0, %s114
    %s117 = sphi 0, %s116
    %s131 = sphi 0, %s117
    %s135 = sphi 0, %s135
    %s137 = sphi 0, %s135
    %s138 = sphi 0, %s137
    %s152 = sphi 0, %s138
    %s158 = sphi 0, %s160
    %s161 = sphi 0, %s158
    %s162 = sphi 0, %s161
    %s178 = sphi 0, %s162
  $region4: #{icm_forward.1} parent=0 // loop_header_branch
    %15 = sbr.rel (%p13) target = $region8
  $region5: #{icm_forward.1} parent=0 // loop_body
    %s17 = ssub.s32 %s12, 1
    %s18 = ssub.s32 %s12, 2
    %s19 = sadd.s32 %s12, 1
    %s20 = ssub.s32 %s12, %s19
    %p21 = scmp.eq.s32.totalorder %s20, 0
    %s23 = sadd.s32 %s22, 1
    %s24 = scalar_select %p21, %s22, %s23
    %p27 = pneg %p21
    %p28 = scmp.eq.s32.totalorder %s12, 2
    %p29 = por %p27, %p28
    %p30 = scmp.ne.s32.totalorder %s22, %s25
    %p31 = scmp.eq.s32.totalorder %s12, 0
    %p32 = por %p30, %p31
    %p33 = scmp.ne.s32.totalorder %s22, %s25
    %p34 = scmp.eq.s32.totalorder %s17, 2
    %p35 = por %p33, %p34
    %p36 = scmp.ne.s32.totalorder %s25, %s26
    %p37 = scmp.eq.s32.totalorder %s17, 0
    %p38 = por %p36, %p37
    %p39 = scmp.ne.s32.totalorder %s25, %s26
    %p40 = scmp.eq.s32.totalorder %s18, 2
    %p41 = por %p39, %p40
    %p43 = scmp.ne.s32.totalorder %s26, %s42
    %p44 = scmp.eq.s32.totalorder %s18, 0
    %p45 = por %p43, %p44
    %s46 = ssub.s32 %s12, %s19
    %p47 = scmp.eq.s32.totalorder %s46, 0
    %s49 = sadd.s32 %s48, 1
    %s50 = scalar_select %p47, %s48, %s49
    %p53 = pneg %p47
    %p54 = scmp.eq.s32.totalorder %s12, 2
    %p55 = por %p53, %p54
    %p56 = scmp.ne.s32.totalorder %s48, %s51
    %p57 = scmp.eq.s32.totalorder %s12, 0
    %p58 = por %p56, %p57
    %p59 = scmp.ne.s32.totalorder %s48, %s51
    %p60 = scmp.eq.s32.totalorder %s17, 2
    %p61 = por %p59, %p60
    %p62 = scmp.ne.s32.totalorder %s51, %s52
    %p63 = scmp.eq.s32.totalorder %s17, 0
    %p64 = por %p62, %p63
    %p65 = scmp.ne.s32.totalorder %s51, %s52
    %p66 = scmp.eq.s32.totalorder %s18, 2
    %p67 = por %p65, %p66
    %p69 = scmp.ne.s32.totalorder %s52, %s68
    %p70 = scmp.eq.s32.totalorder %s18, 0
    %p71 = por %p69, %p70
    %s73 = sadd.s32 %s72, 1
    %p76 = scmp.eq.s32.totalorder %s12, 2
    %p77 = scmp.ne.s32.totalorder %s72, %s74
    %p78 = scmp.eq.s32.totalorder %s12, 0
    %p79 = por %p77, %p78
    %p80 = scmp.ne.s32.totalorder %s72, %s74
    %p81 = scmp.eq.s32.totalorder %s17, 2
    %p82 = por %p80, %p81
    %p83 = scmp.ne.s32.totalorder %s74, %s75
    %p84 = scmp.eq.s32.totalorder %s17, 0
    %p85 = por %p83, %p84
    %p86 = scmp.ne.s32.totalorder %s74, %s75
    %p87 = scmp.eq.s32.totalorder %s18, 2
    %p88 = por %p86, %p87
    %p90 = scmp.ne.s32.totalorder %s75, %s89
    %p91 = scmp.eq.s32.totalorder %s18, 0
    %p92 = por %p90, %p91
    %s94 = sadd.s32 %s93, 1
    %p97 = scmp.eq.s32.totalorder %s12, 2
    %p98 = scmp.ne.s32.totalorder %s93, %s95
    %p99 = scmp.eq.s32.totalorder %s12, 0
    %p100 = por %p98, %p99
    %p101 = scmp.ne.s32.totalorder %s93, %s95
    %p102 = scmp.eq.s32.totalorder %s17, 2
    %p103 = por %p101, %p102
    %p104 = scmp.ne.s32.totalorder %s95, %s96
    %p105 = scmp.eq.s32.totalorder %s17, 0
    %p106 = por %p104, %p105
    %p107 = scmp.ne.s32.totalorder %s95, %s96
    %p108 = scmp.eq.s32.totalorder %s18, 2
    %p109 = por %p107, %p108
    %p111 = scmp.ne.s32.totalorder %s96, %s110
    %p112 = scmp.eq.s32.totalorder %s18, 0
    %p113 = por %p111, %p112
    %s115 = sadd.s32 %s114, 1
    %p118 = scmp.eq.s32.totalorder %s12, 2
    %p119 = scmp.ne.s32.totalorder %s114, %s116
    %p120 = scmp.eq.s32.totalorder %s12, 0
    %p121 = por %p119, %p120
    %p122 = scmp.ne.s32.totalorder %s114, %s116
    %p123 = scmp.eq.s32.totalorder %s17, 2
    %p124 = por %p122, %p123
    %p125 = scmp.ne.s32.totalorder %s116, %s117
    %p126 = scmp.eq.s32.totalorder %s17, 0
    %p127 = por %p125, %p126
    %p128 = scmp.ne.s32.totalorder %s116, %s117
    %p129 = scmp.eq.s32.totalorder %s18, 2
    %p130 = por %p128, %p129
    %p132 = scmp.ne.s32.totalorder %s117, %s131
    %p133 = scmp.eq.s32.totalorder %s18, 0
    %p134 = por %p132, %p133
    %s136 = sadd.s32 %s135, 1
    %p139 = scmp.eq.s32.totalorder %s12, 2
    %p140 = scmp.ne.s32.totalorder %s135, %s137
    %p141 = scmp.eq.s32.totalorder %s12, 0
    %p142 = por %p140, %p141
    %p143 = scmp.ne.s32.totalorder %s135, %s137
    %p144 = scmp.eq.s32.totalorder %s17, 2
    %p145 = por %p143, %p144
    %p146 = scmp.ne.s32.totalorder %s137, %s138
    %p147 = scmp.eq.s32.totalorder %s17, 0
    %p148 = por %p146, %p147
    %p149 = scmp.ne.s32.totalorder %s137, %s138
    %p150 = scmp.eq.s32.totalorder %s18, 2
    %p151 = por %p149, %p150
    %p153 = scmp.ne.s32.totalorder %s138, %s152
    %p154 = scmp.eq.s32.totalorder %s18, 0
    %p155 = por %p153, %p154
    %s156 = ssub.s32 %s12, %s19
    %p157 = scmp.eq.s32.totalorder %s156, 0
    %s159 = sadd.s32 %s158, 1
    %s160 = scalar_select %p157, %s158, %s159
    %p163 = pneg %p157
    %p164 = scmp.eq.s32.totalorder %s12, 2
    %p165 = por %p163, %p164
    %p166 = scmp.ne.s32.totalorder %s158, %s161
    %p167 = scmp.eq.s32.totalorder %s12, 0
    %p168 = por %p166, %p167
    %p169 = scmp.ne.s32.totalorder %s158, %s161
    %p170 = scmp.eq.s32.totalorder %s17, 2
    %p171 = por %p169, %p170
    %p172 = scmp.ne.s32.totalorder %s161, %s162
    %p173 = scmp.eq.s32.totalorder %s17, 0
    %p174 = por %p172, %p173
    %p175 = scmp.ne.s32.totalorder %s161, %s162
    %p176 = scmp.eq.s32.totalorder %s18, 2
    %p177 = por %p175, %p176
    %p179 = scmp.ne.s32.totalorder %s162, %s178
    %p180 = scmp.eq.s32.totalorder %s18, 0
    %p181 = por %p179, %p180
    %p182 = scmp.le.s32.totalorder 1, %s12
    %p183 = scmp.lt.s32.totalorder %s12, 4
    %p184 = pnand %p182, %p183
    %p185 = pneg %p184
    // Predicated region
    $region9: #{icm_forward.1} parent=5 // pred_check
      _
    $region10: #{icm_forward.1} parent=5 // pred_check_branch
      %187 = sbr.rel (%p184) target = $region12
    $region11: #{icm_forward.1} parent=5 // pred_region
      %s188 = ssub.s32 %s12, 1
      // Predicated region
      $region13: #{icm_forward.1} parent=11 // pred_check
        %p189 = pneg %p85
      $region14: #{icm_forward.1} parent=11 // pred_check_branch
        %191 = sbr.rel (%p189) target = $region16
      $region15: #{icm_forward.1} parent=11 // pred_region
        _
      $region16: #{icm_forward.1} parent=11 // pred_fallthru
        _
      // Predicated region
      $region17: #{icm_forward.1} parent=11 // pred_check
        %p192 = pneg %p106
      $region18: #{icm_forward.1} parent=11 // pred_check_branch
        %194 = sbr.rel (%p192) target = $region20
      $region19: #{icm_forward.1} parent=11 // pred_region
        _
      $region20: #{icm_forward.1} parent=11 // pred_fallthru
        _
      // Predicated region
      $region21: #{icm_forward.1} parent=11 // pred_check
        %p195 = pneg %p127
      $region22: #{icm_forward.1} parent=11 // pred_check_branch
        %197 = sbr.rel (%p195) target = $region24
      $region23: #{icm_forward.1} parent=11 // pred_region
        _
      $region24: #{icm_forward.1} parent=11 // pred_fallthru
        _
      // Predicated region
      $region25: #{icm_forward.1} parent=11 // pred_check
        %p198 = pneg %p148
      $region26: #{icm_forward.1} parent=11 // pred_check_branch
        %200 = sbr.rel (%p198) target = $region28
      $region27: #{icm_forward.1} parent=11 // pred_region
        _
      $region28: #{icm_forward.1} parent=11 // pred_fallthru
        _
    $region12: #{icm_forward.1} parent=5 // pred_fallthru
      _
    %p201 = scmp.lt.s32.totalorder %s12, 3
    // Predicated region
    $region29: #{icm_forward.1} parent=5 // pred_check
      %p202 = pneg %p201
    $region30: #{icm_forward.1} parent=5 // pred_check_branch
      %204 = sbr.rel (%p202) target = $region32
    $region31: #{icm_forward.1} parent=5 // pred_region
      // Predicated region
      $region33: #{icm_forward.1} parent=31 // pred_check
        %p205 = pneg %p32
      $region34: #{icm_forward.1} parent=31 // pred_check_branch
        %207 = sbr.rel (%p205) target = $region36
      $region35: #{icm_forward.1} parent=31 // pred_region
        %s208 = smul.u32 16, %s12
        %p209 = scmp.lt.s32.totalorder %s208, 47
        %s210 = scalar_select %p209, %s208, 47
        %s211 = smul.addr %s210, 8
        %s212 = scalar_lea.vmem %s0, %s211
        %s213 = smul.u32 16, %s12
      $region36: #{icm_forward.1} parent=31 // pred_fallthru
        _
      // Predicated region
      $region37: #{icm_forward.1} parent=31 // pred_check
        %p214 = pneg %p58
      $region38: #{icm_forward.1} parent=31 // pred_check_branch
        %216 = sbr.rel (%p214) target = $region40
      $region39: #{icm_forward.1} parent=31 // pred_region
        %s217 = smul.u32 16, %s12
        %p218 = scmp.lt.s32.totalorder %s217, 47
        %s219 = scalar_select %p218, %s217, 47
        %s220 = smul.addr %s219, 8
        %s221 = scalar_lea.vmem %s1, %s220
        %s222 = smul.u32 16, %s12
      $region40: #{icm_forward.1} parent=31 // pred_fallthru
        _
    $region32: #{icm_forward.1} parent=5 // pred_fallthru
      _
    %p223 = scmp.le.s32.totalorder 1, %s12
    %p224 = scmp.lt.s32.totalorder %s12, 4
    %p225 = pnand %p223, %p224
    %p226 = pneg %p225
    // Predicated region
    $region41: #{icm_forward.1} parent=5 // pred_check
      _
    $region42: #{icm_forward.1} parent=5 // pred_check_branch
      %228 = sbr.rel (%p225) target = $region44
    $region43: #{icm_forward.1} parent=5 // pred_region
      %s229 = ssub.s32 %s12, 1
      %s230 = smul.u32 16, %s17
      %p231 = scmp.lt.s32.totalorder %s230, 47
      %s232 = scalar_select %p231, %s230, 47
      %s233 = smul.addr %s232, 8
      %s234 = scalar_lea.vmem %s0, %s233
      %p235 = pneg %p38
      %p236 = pneg %p35
      %s237 = smul.u32 16, %s17
      %p238 = scmp.lt.s32.totalorder %s237, 47
      %s239 = scalar_select %p238, %s237, 47
      %s240 = smul.addr %s239, 8
      %s241 = scalar_lea.vmem %s1, %s240
      %p242 = pneg %p64
      %p243 = pneg %p61
      %p244 = pneg %p85
      %p245 = pneg %p82
      %p246 = pneg %p106
      %p247 = pneg %p103
      %p248 = pneg %p127
      %p249 = pneg %p124
      %p250 = pneg %p148
      %p251 = pneg %p145
      %p252 = pneg %p174
      %p253 = pneg %p171
      %s254 = smul.u32 16, %s17
      %p255 = scmp.lt.s32.totalorder %s254, 47
      %s256 = scalar_select %p255, %s254, 47
      %s257 = smul.addr %s256, 8
      %s258 = scalar_lea.vmem %s6, %s257
      %s259 = smul.u32 16, %s17
      %p260 = scmp.lt.s32.totalorder %s259, 47
      %s261 = scalar_select %p260, %s259, 47
      %s262 = smul.addr %s261, 8
      %s263 = scalar_lea.vmem %s0, %s262
      %s264 = smul.u32 16, %s17
      %s265 = smul.u32 16, %s17
      %p266 = scmp.lt.s32.totalorder %s265, 47
      %s267 = scalar_select %p266, %s265, 47
      %s268 = smul.addr %s267, 8
      %s269 = scalar_lea.vmem %s1, %s268
      %s270 = smul.u32 16, %s17
      %s271 = smul.u32 16, %s17
      %p272 = scmp.lt.s32.totalorder %s271, 47
      %s273 = scalar_select %p272, %s271, 47
      %s274 = smul.addr %s273, 8
      %s275 = scalar_lea.vmem %s6, %s274
      %s276 = smul.u32 16, %s17
      %v277 = vld [vmem:[%s263] sm:$0xff]
      %v278 = vld [vmem:[%s263 + $0x8] sm:$0xff]
      %v279 = vld [vmem:[%s263 + $0x10] sm:$0xff]
      %v280 = vld [vmem:[%s263 + $0x18] sm:$0xff]
      %v281 = vld [vmem:[%s263 + $0x20] sm:$0xff]
      %v282 = vld [vmem:[%s263 + $0x28] sm:$0xff]
      %v283 = vld [vmem:[%s263 + $0x30] sm:$0xff]
      %v284 = vld [vmem:[%s263 + $0x38] sm:$0xff]
      %v285 = vld [vmem:[%s263 + $0x40] sm:$0xff]
      %v286 = vld [vmem:[%s263 + $0x48] sm:$0xff]
      %v287 = vld [vmem:[%s263 + $0x50] sm:$0xff]
      %v288 = vld [vmem:[%s263 + $0x58] sm:$0xff]
      %v289 = vld [vmem:[%s263 + $0x60] sm:$0xff]
      %v290 = vld [vmem:[%s263 + $0x68] sm:$0xff]
      %v291 = vld [vmem:[%s263 + $0x70] sm:$0xff]
      %v292 = vld [vmem:[%s263 + $0x78] sm:$0xff]
      %v293 = vld [vmem:[%s269] sm:$0xff]
      %v294 = vld [vmem:[%s269 + $0x8] sm:$0xff]
      %v295 = vld [vmem:[%s269 + $0x10] sm:$0xff]
      %v296 = vld [vmem:[%s269 + $0x18] sm:$0xff]
      %v297 = vld [vmem:[%s269 + $0x20] sm:$0xff]
      %v298 = vld [vmem:[%s269 + $0x28] sm:$0xff]
      %v299 = vld [vmem:[%s269 + $0x30] sm:$0xff]
      %v300 = vld [vmem:[%s269 + $0x38] sm:$0xff]
      %v301 = vld [vmem:[%s269 + $0x40] sm:$0xff]
      %v302 = vld [vmem:[%s269 + $0x48] sm:$0xff]
      %v303 = vld [vmem:[%s269 + $0x50] sm:$0xff]
      %v304 = vld [vmem:[%s269 + $0x58] sm:$0xff]
      %v305 = vld [vmem:[%s269 + $0x60] sm:$0xff]
      %v306 = vld [vmem:[%s269 + $0x68] sm:$0xff]
      %v307 = vld [vmem:[%s269 + $0x70] sm:$0xff]
      %v308 = vld [vmem:[%s269 + $0x78] sm:$0xff]
      %v309 = vld [vmem:[%s2] sm:$0xff]
      %v310 = vld [vmem:[%s2 + $0x8] sm:$0xff]
      %v311 = vld [vmem:[%s2 + $0x10] sm:$0xff]
      %v312 = vld [vmem:[%s2 + $0x18] sm:$0xff]
      %v313 = vld [vmem:[%s2 + $0x20] sm:$0xff]
      %v314 = vld [vmem:[%s2 + $0x28] sm:$0xff]
      %v315 = vld [vmem:[%s2 + $0x30] sm:$0xff]
      %v316 = vld [vmem:[%s2 + $0x38] sm:$0xff]
      %v317 = vld [vmem:[%s2 + $0x40] sm:$0xff]
      %v318 = vld [vmem:[%s2 + $0x48] sm:$0xff]
      %v319 = vld [vmem:[%s2 + $0x50] sm:$0xff]
      %v320 = vld [vmem:[%s2 + $0x58] sm:$0xff]
      %v321 = vld [vmem:[%s2 + $0x60] sm:$0xff]
      %v322 = vld [vmem:[%s2 + $0x68] sm:$0xff]
      %v323 = vld [vmem:[%s2 + $0x70] sm:$0xff]
      %v324 = vld [vmem:[%s2 + $0x78] sm:$0xff]
      %v325 = vld [vmem:[%s3] sm:$0x1]
      %v327 = vlaneseq
      %v328 = vshrl.u32 %v327, 7
      %v329 = vsub.s32 0, %v328
      %v330 = vrot.slane %v325, %v329
      %332 = vmatprep.subr.mxu0 0.0
      %333 = vmatpush1.msra.mxu0 %v309
      %334 = vmatprep.subr.mxu0 0.0
      %335 = vmatpush1.msra.mxu0 %v310
      %336 = vmatprep.subr.mxu0 0.0
      %337 = vmatpush1.msra.mxu0 %v311
      %338 = vmatprep.subr.mxu0 0.0
      %339 = vmatpush1.msra.mxu0 %v312
      %340 = vmatprep.subr.mxu0 0.0
      %341 = vmatpush1.msra.mxu0 %v313
      %342 = vmatprep.subr.mxu0 0.0
      %343 = vmatpush1.msra.mxu0 %v314
      %344 = vmatprep.subr.mxu0 0.0
      %345 = vmatpush1.msra.mxu0 %v315
      %346 = vmatprep.subr.mxu0 0.0
      %347 = vmatpush1.msra.mxu0 %v316
      %348 = vmatprep.subr.mxu0 0.0
      %349 = vmatpush1.msra.mxu0 %v317
      %350 = vmatprep.subr.mxu0 0.0
      %351 = vmatpush1.msra.mxu0 %v318
      %352 = vmatprep.subr.mxu0 0.0
      %353 = vmatpush1.msra.mxu0 %v319
      %354 = vmatprep.subr.mxu0 0.0
      %355 = vmatpush1.msra.mxu0 %v320
      %356 = vmatprep.subr.mxu0 0.0
      %357 = vmatpush1.msra.mxu0 %v321
      %358 = vmatprep.subr.mxu0 0.0
      %359 = vmatpush1.msra.mxu0 %v322
      %360 = vmatprep.subr.mxu0 0.0
      %361 = vmatpush1.msra.mxu0 %v323
      %362 = vmatprep.subr.mxu0 0.0
      %363 = vmatpush1.msra.mxu0 %v324
      %364 = vmatprep.subr.mxu0 0.0
      %365 = vmatpush1.msra.mxu0 0.0
      %366 = vmatprep.subr.mxu0 0.0
      %367 = vmatpush1.msra.mxu0 0.0
      %368 = vmatprep.subr.mxu0 0.0
      %369 = vmatpush1.msra.mxu0 0.0
      %370 = vmatprep.subr.mxu0 0.0
      %371 = vmatpush1.msra.mxu0 0.0
      %372 = vmatprep.subr.mxu0 0.0
      %373 = vmatpush1.msra.mxu0 0.0
      %374 = vmatprep.subr.mxu0 0.0
      %375 = vmatpush1.msra.mxu0 0.0
      %376 = vmatprep.subr.mxu0 0.0
      %377 = vmatpush1.msra.mxu0 0.0
      %378 = vmatprep.subr.mxu0 0.0
      %379 = vmatpush1.msra.mxu0 0.0
      %380 = vmatprep.subr.mxu0 0.0
      %381 = vmatpush1.msra.mxu0 0.0
      %382 = vmatprep.subr.mxu0 0.0
      %383 = vmatpush1.msra.mxu0 0.0
      %384 = vmatprep.subr.mxu0 0.0
      %385 = vmatpush1.msra.mxu0 0.0
      %386 = vmatprep.subr.mxu0 0.0
      %387 = vmatpush1.msra.mxu0 0.0
      %388 = vmatprep.subr.mxu0 0.0
      %389 = vmatpush1.msra.mxu0 0.0
      %390 = vmatprep.subr.mxu0 0.0
      %391 = vmatpush1.msra.mxu0 0.0
      %392 = vmatprep.subr.mxu0 0.0
      %393 = vmatpush1.msra.mxu0 0.0
      %394 = vmatprep.subr.mxu0 0.0
      %395 = vmatpush1.msra.mxu0 0.0
      %396 = vmatprep.mubr.f32.mxu0 0.0
      %397 = vmatmul.mubr.f32.gmra.mrb[0].mxu0 %v277
      %v398 = vpop.f32.mrb[0].mxu0
      %v399 = vadd.f32 %v330, %v398
      %v400 = vpop.f32.mrb[0].mxu0
      %401 = vmatprep.mubr.f32.mxu0 0.0
      %402 = vmatmul.mubr.f32.gmra.mrb[0].mxu0 %v278
      %v403 = vpop.f32.mrb[0].mxu0
      %v404 = vadd.f32 %v330, %v403
      %v405 = vpop.f32.mrb[0].mxu0
      %406 = vmatprep.mubr.f32.mxu0 0.0
      %407 = vmatmul.mubr.f32.gmra.mrb[0].mxu0 %v279
      %v408 = vpop.f32.mrb[0].mxu0
      %v409 = vadd.f32 %v330, %v408
      %v410 = vpop.f32.mrb[0].mxu0
      %411 = vmatprep.mubr.f32.mxu0 0.0
      %412 = vmatmul.mubr.f32.gmra.mrb[0].mxu0 %v280
      %v413 = vpop.f32.mrb[0].mxu0
      %v414 = vadd.f32 %v330, %v413
      %v415 = vpop.f32.mrb[0].mxu0
      %416 = vmatprep.mubr.f32.mxu0 0.0
      %417 = vmatmul.mubr.f32.gmra.mrb[0].mxu0 %v281
      %v418 = vpop.f32.mrb[0].mxu0
      %v419 = vadd.f32 %v330, %v418
      %v420 = vpop.f32.mrb[0].mxu0
      %421 = vmatprep.mubr.f32.mxu0 0.0
      %422 = vmatmul.mubr.f32.gmra.mrb[0].mxu0 %v282
      %v423 = vpop.f32.mrb[0].mxu0
      %v424 = vadd.f32 %v330, %v423
      %v425 = vpop.f32.mrb[0].mxu0
      %426 = vmatprep.mubr.f32.mxu0 0.0
      %427 = vmatmul.mubr.f32.gmra.mrb[0].mxu0 %v283
      %v428 = vpop.f32.mrb[0].mxu0
      %v429 = vadd.f32 %v330, %v428
      %v430 = vpop.f32.mrb[0].mxu0
      %431 = vmatprep.mubr.f32.mxu0 0.0
      %432 = vmatmul.mubr.f32.gmra.mrb[0].mxu0 %v284
      %v433 = vpop.f32.mrb[0].mxu0
      %v434 = vadd.f32 %v330, %v433
      %v435 = vpop.f32.mrb[0].mxu0
      %436 = vmatprep.mubr.f32.mxu0 0.0
      %437 = vmatmul.mubr.f32.gmra.mrb[0].mxu0 %v285
      %v438 = vpop.f32.mrb[0].mxu0
      %v439 = vadd.f32 %v330, %v438
      %v440 = vpop.f32.mrb[0].mxu0
      %441 = vmatprep.mubr.f32.mxu0 0.0
      %442 = vmatmul.mubr.f32.gmra.mrb[0].mxu0 %v286
      %v443 = vpop.f32.mrb[0].mxu0
      %v444 = vadd.f32 %v330, %v443
      %v445 = vpop.f32.mrb[0].mxu0
      %446 = vmatprep.mubr.f32.mxu0 0.0
      %447 = vmatmul.mubr.f32.gmra.mrb[0].mxu0 %v287
      %v448 = vpop.f32.mrb[0].mxu0
      %v449 = vadd.f32 %v330, %v448
      %v450 = vpop.f32.mrb[0].mxu0
      %451 = vmatprep.mubr.f32.mxu0 0.0
      %452 = vmatmul.mubr.f32.gmra.mrb[0].mxu0 %v288
      %v453 = vpop.f32.mrb[0].mxu0
      %v454 = vadd.f32 %v330, %v453
      %v455 = vpop.f32.mrb[0].mxu0
      %456 = vmatprep.mubr.f32.mxu0 0.0
      %457 = vmatmul.mubr.f32.gmra.mrb[0].mxu0 %v289
      %v458 = vpop.f32.mrb[0].mxu0
      %v459 = vadd.f32 %v330, %v458
      %v460 = vpop.f32.mrb[0].mxu0
      %461 = vmatprep.mubr.f32.mxu0 0.0
      %462 = vmatmul.mubr.f32.gmra.mrb[0].mxu0 %v290
      %v463 = vpop.f32.mrb[0].mxu0
      %v464 = vadd.f32 %v330, %v463
      %v465 = vpop.f32.mrb[0].mxu0
      %466 = vmatprep.mubr.f32.mxu0 0.0
      %467 = vmatmul.mubr.f32.gmra.mrb[0].mxu0 %v291
      %v468 = vpop.f32.mrb[0].mxu0
      %v469 = vadd.f32 %v330, %v468
      %v470 = vpop.f32.mrb[0].mxu0
      %471 = vmatprep.mubr.f32.mxu0 0.0
      %472 = vmatmul.mubr.f32.gmra.mrb[0].mxu0 %v292
      %v473 = vpop.f32.mrb[0].mxu0
      %v474 = vadd.f32 %v330, %v473
      %v475 = vpop.f32.mrb[0].mxu0
      %476 = vdwg.mxu0
      %v477 = vmax.f32 %v399, 0.0
      %v478 = vmax.f32 %v404, 0.0
      %v479 = vmax.f32 %v409, 0.0
      %v480 = vmax.f32 %v414, 0.0
      %v481 = vmax.f32 %v419, 0.0
      %v482 = vmax.f32 %v424, 0.0
      %v483 = vmax.f32 %v429, 0.0
      %v484 = vmax.f32 %v434, 0.0
      %v485 = vmax.f32 %v439, 0.0
      %v486 = vmax.f32 %v444, 0.0
      %v487 = vmax.f32 %v449, 0.0
      %v488 = vmax.f32 %v454, 0.0
      %v489 = vmax.f32 %v459, 0.0
      %v490 = vmax.f32 %v464, 0.0
      %v491 = vmax.f32 %v469, 0.0
      %v492 = vmax.f32 %v474, 0.0
      %493 = vmatprep.subr.mxu0 0.0
      %494 = vmatpush1.msra.mxu0 %v309
      %495 = vmatprep.subr.mxu0 0.0
      %496 = vmatpush1.msra.mxu0 %v310
      %497 = vmatprep.subr.mxu0 0.0
      %498 = vmatpush1.msra.mxu0 %v311
      %499 = vmatprep.subr.mxu0 0.0
      %500 = vmatpush1.msra.mxu0 %v312
      %501 = vmatprep.subr.mxu0 0.0
      %502 = vmatpush1.msra.mxu0 %v313
      %503 = vmatprep.subr.mxu0 0.0
      %504 = vmatpush1.msra.mxu0 %v314
      %505 = vmatprep.subr.mxu0 0.0
      %506 = vmatpush1.msra.mxu0 %v315
      %507 = vmatprep.subr.mxu0 0.0
      %508 = vmatpush1.msra.mxu0 %v316
      %509 = vmatprep.subr.mxu0 0.0
      %510 = vmatpush1.msra.mxu0 %v317
      %511 = vmatprep.subr.mxu0 0.0
      %512 = vmatpush1.msra.mxu0 %v318
      %513 = vmatprep.subr.mxu0 0.0
      %514 = vmatpush1.msra.mxu0 %v319
      %515 = vmatprep.subr.mxu0 0.0
      %516 = vmatpush1.msra.mxu0 %v320
      %517 = vmatprep.subr.mxu0 0.0
      %518 = vmatpush1.msra.mxu0 %v321
      %519 = vmatprep.subr.mxu0 0.0
      %520 = vmatpush1.msra.mxu0 %v322
      %521 = vmatprep.subr.mxu0 0.0
      %522 = vmatpush1.msra.mxu0 %v323
      %523 = vmatprep.subr.mxu0 0.0
      %524 = vmatpush1.msra.mxu0 %v324
      %525 = vmatprep.subr.mxu0 0.0
      %526 = vmatpush1.msra.mxu0 0.0
      %527 = vmatprep.subr.mxu0 0.0
      %528 = vmatpush1.msra.mxu0 0.0
      %529 = vmatprep.subr.mxu0 0.0
      %530 = vmatpush1.msra.mxu0 0.0
      %531 = vmatprep.subr.mxu0 0.0
      %532 = vmatpush1.msra.mxu0 0.0
      %533 = vmatprep.subr.mxu0 0.0
      %534 = vmatpush1.msra.mxu0 0.0
      %535 = vmatprep.subr.mxu0 0.0
      %536 = vmatpush1.msra.mxu0 0.0
      %537 = vmatprep.subr.mxu0 0.0
      %538 = vmatpush1.msra.mxu0 0.0
      %539 = vmatprep.subr.mxu0 0.0
      %540 = vmatpush1.msra.mxu0 0.0
      %541 = vmatprep.subr.mxu0 0.0
      %542 = vmatpush1.msra.mxu0 0.0
      %543 = vmatprep.subr.mxu0 0.0
      %544 = vmatpush1.msra.mxu0 0.0
      %545 = vmatprep.subr.mxu0 0.0
      %546 = vmatpush1.msra.mxu0 0.0
      %547 = vmatprep.subr.mxu0 0.0
      %548 = vmatpush1.msra.mxu0 0.0
      %549 = vmatprep.subr.mxu0 0.0
      %550 = vmatpush1.msra.mxu0 0.0
      %551 = vmatprep.subr.mxu0 0.0
      %552 = vmatpush1.msra.mxu0 0.0
      %553 = vmatprep.subr.mxu0 0.0
      %554 = vmatpush1.msra.mxu0 0.0
      %555 = vmatprep.subr.mxu0 0.0
      %556 = vmatpush1.msra.mxu0 0.0
      %557 = vmatprep.mubr.f32.mxu0 0.0
      %558 = vmatmul.mubr.f32.gmra.mrb[0].mxu0 %v293
      %v559 = vpop.f32.mrb[0].mxu0
      %v560 = vadd.f32 %v330, %v559
      %v561 = vpop.f32.mrb[0].mxu0
      %562 = vmatprep.mubr.f32.mxu0 0.0
      %563 = vmatmul.mubr.f32.gmra.mrb[0].mxu0 %v294
      %v564 = vpop.f32.mrb[0].mxu0
      %v565 = vadd.f32 %v330, %v564
      %v566 = vpop.f32.mrb[0].mxu0
      %567 = vmatprep.mubr.f32.mxu0 0.0
      %568 = vmatmul.mubr.f32.gmra.mrb[0].mxu0 %v295
      %v569 = vpop.f32.mrb[0].mxu0
      %v570 = vadd.f32 %v330, %v569
      %v571 = vpop.f32.mrb[0].mxu0
      %572 = vmatprep.mubr.f32.mxu0 0.0
      %573 = vmatmul.mubr.f32.gmra.mrb[0].mxu0 %v296
      %v574 = vpop.f32.mrb[0].mxu0
      %v575 = vadd.f32 %v330, %v574
      %v576 = vpop.f32.mrb[0].mxu0
      %577 = vmatprep.mubr.f32.mxu0 0.0
      %578 = vmatmul.mubr.f32.gmra.mrb[0].mxu0 %v297
      %v579 = vpop.f32.mrb[0].mxu0
      %v580 = vadd.f32 %v330, %v579
      %v581 = vpop.f32.mrb[0].mxu0
      %582 = vmatprep.mubr.f32.mxu0 0.0
      %583 = vmatmul.mubr.f32.gmra.mrb[0].mxu0 %v298
      %v584 = vpop.f32.mrb[0].mxu0
      %v585 = vadd.f32 %v330, %v584
      %v586 = vpop.f32.mrb[0].mxu0
      %587 = vmatprep.mubr.f32.mxu0 0.0
      %588 = vmatmul.mubr.f32.gmra.mrb[0].mxu0 %v299
      %v589 = vpop.f32.mrb[0].mxu0
      %v590 = vadd.f32 %v330, %v589
      %v591 = vpop.f32.mrb[0].mxu0
      %592 = vmatprep.mubr.f32.mxu0 0.0
      %593 = vmatmul.mubr.f32.gmra.mrb[0].mxu0 %v300
      %v594 = vpop.f32.mrb[0].mxu0
      %v595 = vadd.f32 %v330, %v594
      %v596 = vpop.f32.mrb[0].mxu0
      %597 = vmatprep.mubr.f32.mxu0 0.0
      %598 = vmatmul.mubr.f32.gmra.mrb[0].mxu0 %v301
      %v599 = vpop.f32.mrb[0].mxu0
      %v600 = vadd.f32 %v330, %v599
      %v601 = vpop.f32.mrb[0].mxu0
      %602 = vmatprep.mubr.f32.mxu0 0.0
      %603 = vmatmul.mubr.f32.gmra.mrb[0].mxu0 %v302
      %v604 = vpop.f32.mrb[0].mxu0
      %v605 = vadd.f32 %v330, %v604
      %v606 = vpop.f32.mrb[0].mxu0
      %607 = vmatprep.mubr.f32.mxu0 0.0
      %608 = vmatmul.mubr.f32.gmra.mrb[0].mxu0 %v303
      %v609 = vpop.f32.mrb[0].mxu0
      %v610 = vadd.f32 %v330, %v609
      %v611 = vpop.f32.mrb[0].mxu0
      %612 = vmatprep.mubr.f32.mxu0 0.0
      %613 = vmatmul.mubr.f32.gmra.mrb[0].mxu0 %v304
      %v614 = vpop.f32.mrb[0].mxu0
      %v615 = vadd.f32 %v330, %v614
      %v616 = vpop.f32.mrb[0].mxu0
      %617 = vmatprep.mubr.f32.mxu0 0.0
      %618 = vmatmul.mubr.f32.gmra.mrb[0].mxu0 %v305
      %v619 = vpop.f32.mrb[0].mxu0
      %v620 = vadd.f32 %v330, %v619
      %v621 = vpop.f32.mrb[0].mxu0
      %622 = vmatprep.mubr.f32.mxu0 0.0
      %623 = vmatmul.mubr.f32.gmra.mrb[0].mxu0 %v306
      %v624 = vpop.f32.mrb[0].mxu0
      %v625 = vadd.f32 %v330, %v624
      %v626 = vpop.f32.mrb[0].mxu0
      %627 = vmatprep.mubr.f32.mxu0 0.0
      %628 = vmatmul.mubr.f32.gmra.mrb[0].mxu0 %v307
      %v629 = vpop.f32.mrb[0].mxu0
      %v630 = vadd.f32 %v330, %v629
      %v631 = vpop.f32.mrb[0].mxu0
      %632 = vmatprep.mubr.f32.mxu0 0.0
      %633 = vmatmul.mubr.f32.gmra.mrb[0].mxu0 %v308
      %v634 = vpop.f32.mrb[0].mxu0
      %v635 = vadd.f32 %v330, %v634
      %v636 = vpop.f32.mrb[0].mxu0
      %637 = vdwg.mxu0
      %v638 = vmax.f32 %v560, 0.0
      %v639 = vmax.f32 %v565, 0.0
      %v640 = vmax.f32 %v570, 0.0
      %v641 = vmax.f32 %v575, 0.0
      %v642 = vmax.f32 %v580, 0.0
      %v643 = vmax.f32 %v585, 0.0
      %v644 = vmax.f32 %v590, 0.0
      %v645 = vmax.f32 %v595, 0.0
      %v646 = vmax.f32 %v600, 0.0
      %v647 = vmax.f32 %v605, 0.0
      %v648 = vmax.f32 %v610, 0.0
      %v649 = vmax.f32 %v615, 0.0
      %v650 = vmax.f32 %v620, 0.0
      %v651 = vmax.f32 %v625, 0.0
      %v652 = vmax.f32 %v630, 0.0
      %v653 = vmax.f32 %v635, 0.0
      %v654 = vld [vmem:[%s4] sm:$0xff]
      %v655 = vld [vmem:[%s4 + $0x8] sm:$0xff]
      %v656 = vld [vmem:[%s4 + $0x10] sm:$0xff]
      %v657 = vld [vmem:[%s4 + $0x18] sm:$0xff]
      %v658 = vld [vmem:[%s4 + $0x20] sm:$0xff]
      %v659 = vld [vmem:[%s4 + $0x28] sm:$0xff]
      %v660 = vld [vmem:[%s4 + $0x30] sm:$0xff]
      %v661 = vld [vmem:[%s4 + $0x38] sm:$0xff]
      %v662 = vld [vmem:[%s4 + $0x40] sm:$0xff]
      %v663 = vld [vmem:[%s4 + $0x48] sm:$0xff]
      %v664 = vld [vmem:[%s4 + $0x50] sm:$0xff]
      %v665 = vld [vmem:[%s4 + $0x58] sm:$0xff]
      %v666 = vld [vmem:[%s4 + $0x60] sm:$0xff]
      %v667 = vld [vmem:[%s4 + $0x68] sm:$0xff]
      %v668 = vld [vmem:[%s4 + $0x70] sm:$0xff]
      %v669 = vld [vmem:[%s4 + $0x78] sm:$0xff]
      %v670 = vld [vmem:[%s5] sm:$0x1]
      %v672 = vlaneseq
      %v673 = vshrl.u32 %v672, 7
      %v674 = vsub.s32 0, %v673
      %v675 = vrot.slane %v670, %v674
      %677 = vmatprep.subr.mxu0 0.0
      %678 = vmatpush1.msra.mxu0 %v654
      %679 = vmatprep.subr.mxu0 0.0
      %680 = vmatpush1.msra.mxu0 %v655
      %681 = vmatprep.subr.mxu0 0.0
      %682 = vmatpush1.msra.mxu0 %v656
      %683 = vmatprep.subr.mxu0 0.0
      %684 = vmatpush1.msra.mxu0 %v657
      %685 = vmatprep.subr.mxu0 0.0
      %686 = vmatpush1.msra.mxu0 %v658
      %687 = vmatprep.subr.mxu0 0.0
      %688 = vmatpush1.msra.mxu0 %v659
      %689 = vmatprep.subr.mxu0 0.0
      %690 = vmatpush1.msra.mxu0 %v660
      %691 = vmatprep.subr.mxu0 0.0
      %692 = vmatpush1.msra.mxu0 %v661
      %693 = vmatprep.subr.mxu0 0.0
      %694 = vmatpush1.msra.mxu0 %v662
      %695 = vmatprep.subr.mxu0 0.0
      %696 = vmatpush1.msra.mxu0 %v663
      %697 = vmatprep.subr.mxu0 0.0
      %698 = vmatpush1.msra.mxu0 %v664
      %699 = vmatprep.subr.mxu0 0.0
      %700 = vmatpush1.msra.mxu0 %v665
      %701 = vmatprep.subr.mxu0 0.0
      %702 = vmatpush1.msra.mxu0 %v666
      %703 = vmatprep.subr.mxu0 0.0
      %704 = vmatpush1.msra.mxu0 %v667
      %705 = vmatprep.subr.mxu0 0.0
      %706 = vmatpush1.msra.mxu0 %v668
      %707 = vmatprep.subr.mxu0 0.0
      %708 = vmatpush1.msra.mxu0 %v669
      %709 = vmatprep.subr.mxu0 0.0
      %710 = vmatpush1.msra.mxu0 0.0
      %711 = vmatprep.subr.mxu0 0.0
      %712 = vmatpush1.msra.mxu0 0.0
      %713 = vmatprep.subr.mxu0 0.0
      %714 = vmatpush1.msra.mxu0 0.0
      %715 = vmatprep.subr.mxu0 0.0
      %716 = vmatpush1.msra.mxu0 0.0
      %717 = vmatprep.subr.mxu0 0.0
      %718 = vmatpush1.msra.mxu0 0.0
      %719 = vmatprep.subr.mxu0 0.0
      %720 = vmatpush1.msra.mxu0 0.0
      %721 = vmatprep.subr.mxu0 0.0
      %722 = vmatpush1.msra.mxu0 0.0
      %723 = vmatprep.subr.mxu0 0.0
      %724 = vmatpush1.msra.mxu0 0.0
      %725 = vmatprep.subr.mxu0 0.0
      %726 = vmatpush1.msra.mxu0 0.0
      %727 = vmatprep.subr.mxu0 0.0
      %728 = vmatpush1.msra.mxu0 0.0
      %729 = vmatprep.subr.mxu0 0.0
      %730 = vmatpush1.msra.mxu0 0.0
      %731 = vmatprep.subr.mxu0 0.0
      %732 = vmatpush1.msra.mxu0 0.0
      %733 = vmatprep.subr.mxu0 0.0
      %734 = vmatpush1.msra.mxu0 0.0
      %735 = vmatprep.subr.mxu0 0.0
      %736 = vmatpush1.msra.mxu0 0.0
      %737 = vmatprep.subr.mxu0 0.0
      %738 = vmatpush1.msra.mxu0 0.0
      %739 = vmatprep.subr.mxu0 0.0
      %740 = vmatpush1.msra.mxu0 0.0
      %741 = vmatprep.mubr.f32.mxu0 0.0
      %742 = vmatmul.mubr.f32.gmra.mrb[0].mxu0 %v477
      %v743 = vpop.f32.mrb[0].mxu0
      %v744 = vadd.f32 %v675, %v743
      %v745 = vpop.f32.mrb[0].mxu0
      %746 = vmatprep.mubr.f32.mxu0 0.0
      %747 = vmatmul.mubr.f32.gmra.mrb[0].mxu0 %v478
      %v748 = vpop.f32.mrb[0].mxu0
      %v749 = vadd.f32 %v675, %v748
      %v750 = vpop.f32.mrb[0].mxu0
      %751 = vmatprep.mubr.f32.mxu0 0.0
      %752 = vmatmul.mubr.f32.gmra.mrb[0].mxu0 %v479
      %v753 = vpop.f32.mrb[0].mxu0
      %v754 = vadd.f32 %v675, %v753
      %v755 = vpop.f32.mrb[0].mxu0
      %756 = vmatprep.mubr.f32.mxu0 0.0
      %757 = vmatmul.mubr.f32.gmra.mrb[0].mxu0 %v480
      %v758 = vpop.f32.mrb[0].mxu0
      %v759 = vadd.f32 %v675, %v758
      %v760 = vpop.f32.mrb[0].mxu0
      %761 = vmatprep.mubr.f32.mxu0 0.0
      %762 = vmatmul.mubr.f32.gmra.mrb[0].mxu0 %v481
      %v763 = vpop.f32.mrb[0].mxu0
      %v764 = vadd.f32 %v675, %v763
      %v765 = vpop.f32.mrb[0].mxu0
      %766 = vmatprep.mubr.f32.mxu0 0.0
      %767 = vmatmul.mubr.f32.gmra.mrb[0].mxu0 %v482
      %v768 = vpop.f32.mrb[0].mxu0
      %v769 = vadd.f32 %v675, %v768
      %v770 = vpop.f32.mrb[0].mxu0
      %771 = vmatprep.mubr.f32.mxu0 0.0
      %772 = vmatmul.mubr.f32.gmra.mrb[0].mxu0 %v483
      %v773 = vpop.f32.mrb[0].mxu0
      %v774 = vadd.f32 %v675, %v773
      %v775 = vpop.f32.mrb[0].mxu0
      %776 = vmatprep.mubr.f32.mxu0 0.0
      %777 = vmatmul.mubr.f32.gmra.mrb[0].mxu0 %v484
      %v778 = vpop.f32.mrb[0].mxu0
      %v779 = vadd.f32 %v675, %v778
      %v780 = vpop.f32.mrb[0].mxu0
      %781 = vmatprep.mubr.f32.mxu0 0.0
      %782 = vmatmul.mubr.f32.gmra.mrb[0].mxu0 %v485
      %v783 = vpop.f32.mrb[0].mxu0
      %v784 = vadd.f32 %v675, %v783
      %v785 = vpop.f32.mrb[0].mxu0
      %786 = vmatprep.mubr.f32.mxu0 0.0
      %787 = vmatmul.mubr.f32.gmra.mrb[0].mxu0 %v486
      %v788 = vpop.f32.mrb[0].mxu0
      %v789 = vadd.f32 %v675, %v788
      %v790 = vpop.f32.mrb[0].mxu0
      %791 = vmatprep.mubr.f32.mxu0 0.0
      %792 = vmatmul.mubr.f32.gmra.mrb[0].mxu0 %v487
      %v793 = vpop.f32.mrb[0].mxu0
      %v794 = vadd.f32 %v675, %v793
      %v795 = vpop.f32.mrb[0].mxu0
      %796 = vmatprep.mubr.f32.mxu0 0.0
      %797 = vmatmul.mubr.f32.gmra.mrb[0].mxu0 %v488
      %v798 = vpop.f32.mrb[0].mxu0
      %v799 = vadd.f32 %v675, %v798
      %v800 = vpop.f32.mrb[0].mxu0
      %801 = vmatprep.mubr.f32.mxu0 0.0
      %802 = vmatmul.mubr.f32.gmra.mrb[0].mxu0 %v489
      %v803 = vpop.f32.mrb[0].mxu0
      %v804 = vadd.f32 %v675, %v803
      %v805 = vpop.f32.mrb[0].mxu0
      %806 = vmatprep.mubr.f32.mxu0 0.0
      %807 = vmatmul.mubr.f32.gmra.mrb[0].mxu0 %v490
      %v808 = vpop.f32.mrb[0].mxu0
      %v809 = vadd.f32 %v675, %v808
      %v810 = vpop.f32.mrb[0].mxu0
      %811 = vmatprep.mubr.f32.mxu0 0.0
      %812 = vmatmul.mubr.f32.gmra.mrb[0].mxu0 %v491
      %v813 = vpop.f32.mrb[0].mxu0
      %v814 = vadd.f32 %v675, %v813
      %v815 = vpop.f32.mrb[0].mxu0
      %816 = vmatprep.mubr.f32.mxu0 0.0
      %817 = vmatmul.mubr.f32.gmra.mrb[0].mxu0 %v492
      %v818 = vpop.f32.mrb[0].mxu0
      %v819 = vadd.f32 %v675, %v818
      %v820 = vpop.f32.mrb[0].mxu0
      %821 = vdwg.mxu0
      %v822 = vsub.f32 %v744, %v638
      %v823 = vsub.f32 %v749, %v639
      %v824 = vsub.f32 %v754, %v640
      %v825 = vsub.f32 %v759, %v641
      %v826 = vsub.f32 %v764, %v642
      %v827 = vsub.f32 %v769, %v643
      %v828 = vsub.f32 %v774, %v644
      %v829 = vsub.f32 %v779, %v645
      %v830 = vsub.f32 %v784, %v646
      %v831 = vsub.f32 %v789, %v647
      %v832 = vsub.f32 %v794, %v648
      %v833 = vsub.f32 %v799, %v649
      %v834 = vsub.f32 %v804, %v650
      %v835 = vsub.f32 %v809, %v651
      %v836 = vsub.f32 %v814, %v652
      %v837 = vsub.f32 %v819, %v653
      %v838 = vmul.f32 %v822, %v822
      %v839 = vmul.f32 %v823, %v823
      %v840 = vmul.f32 %v824, %v824
      %v841 = vmul.f32 %v825, %v825
      %v842 = vmul.f32 %v826, %v826
      %v843 = vmul.f32 %v827, %v827
      %v844 = vmul.f32 %v828, %v828
      %v845 = vmul.f32 %v829, %v829
      %v846 = vmul.f32 %v830, %v830
      %v847 = vmul.f32 %v831, %v831
      %v848 = vmul.f32 %v832, %v832
      %v849 = vmul.f32 %v833, %v833
      %v850 = vmul.f32 %v834, %v834
      %v851 = vmul.f32 %v835, %v835
      %v852 = vmul.f32 %v836, %v836
      %v853 = vmul.f32 %v837, %v837
      %854 = vadd.xlane.f32.xlu0 %v838
      %v855 = vpop.xlane.xlu0 %854
      %856 = vadd.xlane.f32.xlu0 %v839
      %v857 = vpop.xlane.xlu0 %856
      %858 = vadd.xlane.f32.xlu0 %v840
      %v859 = vpop.xlane.xlu0 %858
      %860 = vadd.xlane.f32.xlu0 %v841
      %v861 = vpop.xlane.xlu0 %860
      %862 = vadd.xlane.f32.xlu0 %v842
      %v863 = vpop.xlane.xlu0 %862
      %864 = vadd.xlane.f32.xlu0 %v843
      %v865 = vpop.xlane.xlu0 %864
      %866 = vadd.xlane.f32.xlu0 %v844
      %v867 = vpop.xlane.xlu0 %866
      %868 = vadd.xlane.f32.xlu0 %v845
      %v869 = vpop.xlane.xlu0 %868
      %870 = vadd.xlane.f32.xlu0 %v846
      %v871 = vpop.xlane.xlu0 %870
      %872 = vadd.xlane.f32.xlu0 %v847
      %v873 = vpop.xlane.xlu0 %872
      %874 = vadd.xlane.f32.xlu0 %v848
      %v875 = vpop.xlane.xlu0 %874
      %876 = vadd.xlane.f32.xlu0 %v849
      %v877 = vpop.xlane.xlu0 %876
      %878 = vadd.xlane.f32.xlu0 %v850
      %v879 = vpop.xlane.xlu0 %878
      %880 = vadd.xlane.f32.xlu0 %v851
      %v881 = vpop.xlane.xlu0 %880
      %882 = vadd.xlane.f32.xlu0 %v852
      %v883 = vpop.xlane.xlu0 %882
      %884 = vadd.xlane.f32.xlu0 %v853
      %v885 = vpop.xlane.xlu0 %884
      %v886 = vmul.f32 %v855, 0.03125
      %v887 = vmul.f32 %v857, 0.03125
      %v888 = vmul.f32 %v859, 0.03125
      %v889 = vmul.f32 %v861, 0.03125
      %v890 = vmul.f32 %v863, 0.03125
      %v891 = vmul.f32 %v865, 0.03125
      %v892 = vmul.f32 %v867, 0.03125
      %v893 = vmul.f32 %v869, 0.03125
      %v894 = vmul.f32 %v871, 0.03125
      %v895 = vmul.f32 %v873, 0.03125
      %v896 = vmul.f32 %v875, 0.03125
      %v897 = vmul.f32 %v877, 0.03125
      %v898 = vmul.f32 %v879, 0.03125
      %v899 = vmul.f32 %v881, 0.03125
      %v900 = vmul.f32 %v883, 0.03125
      %v901 = vmul.f32 %v885, 0.03125
      %vm902 = vcmask 7168
      %903 = vst.msk [vmem:[%s275] sm:$0xff] %vm902, %v886
      %904 = vst.msk [vmem:[%s275 + $0x8] sm:$0xff] %vm902, %v887
      %905 = vst.msk [vmem:[%s275 + $0x10] sm:$0xff] %vm902, %v888
      %906 = vst.msk [vmem:[%s275 + $0x18] sm:$0xff] %vm902, %v889
      %907 = vst.msk [vmem:[%s275 + $0x20] sm:$0xff] %vm902, %v890
      %908 = vst.msk [vmem:[%s275 + $0x28] sm:$0xff] %vm902, %v891
      %909 = vst.msk [vmem:[%s275 + $0x30] sm:$0xff] %vm902, %v892
      %910 = vst.msk [vmem:[%s275 + $0x38] sm:$0xff] %vm902, %v893
      %911 = vst.msk [vmem:[%s275 + $0x40] sm:$0xff] %vm902, %v894
      %912 = vst.msk [vmem:[%s275 + $0x48] sm:$0xff] %vm902, %v895
      %913 = vst.msk [vmem:[%s275 + $0x50] sm:$0xff] %vm902, %v896
      %914 = vst.msk [vmem:[%s275 + $0x58] sm:$0xff] %vm902, %v897
      %915 = vst.msk [vmem:[%s275 + $0x60] sm:$0xff] %vm902, %v898
      %916 = vst.msk [vmem:[%s275 + $0x68] sm:$0xff] %vm902, %v899
      %917 = vst.msk [vmem:[%s275 + $0x70] sm:$0xff] %vm902, %v900
      %918 = vst.msk [vmem:[%s275 + $0x78] sm:$0xff] %vm902, %v901
      %s919 = smul.u32 16, %s17
      %p920 = scmp.lt.s32.totalorder %s919, 47
      %s921 = scalar_select %p920, %s919, 47
      %s922 = smul.addr %s921, 8
      %s923 = scalar_lea.vmem %s6, %s922
      // Predicated region
      $region45: #{icm_forward.1} parent=43 // pred_check
        %p924 = pneg %p171
      $region46: #{icm_forward.1} parent=43 // pred_check_branch
        %926 = sbr.rel (%p924) target = $region48
      $region47: #{icm_forward.1} parent=43 // pred_region
        %s927 = smul.u32 16, %s17
      $region48: #{icm_forward.1} parent=43 // pred_fallthru
        _
    $region44: #{icm_forward.1} parent=5 // pred_fallthru
      _
    %p928 = scmp.le.s32.totalorder 2, %s12
    // Predicated region
    $region49: #{icm_forward.1} parent=5 // pred_check
      %p929 = pneg %p928
    $region50: #{icm_forward.1} parent=5 // pred_check_branch
      %931 = sbr.rel (%p929) target = $region52
    $region51: #{icm_forward.1} parent=5 // pred_region
      %s932 = ssub.s32 %s12, 2
      // Predicated region
      $region53: #{icm_forward.1} parent=51 // pred_check
        %p933 = pneg %p177
      $region54: #{icm_forward.1} parent=51 // pred_check_branch
        %935 = sbr.rel (%p933) target = $region56
      $region55: #{icm_forward.1} parent=51 // pred_region
        %s936 = smul.u32 16, %s18
        %p937 = scmp.lt.s32.totalorder %s936, 47
        %s938 = scalar_select %p937, %s936, 47
        %s939 = smul.addr %s938, 8
        %s940 = scalar_lea.vmem %s6, %s939
      $region56: #{icm_forward.1} parent=51 // pred_fallthru
        _
    $region52: #{icm_forward.1} parent=5 // pred_fallthru
      _
  $region6: #{icm_forward.1} parent=0 // loop_footer
    %s16 = sadd.s32 1, %s12
  $region7: #{icm_forward.1} parent=0 // loop_footer_branch
    %11 = sbr.rel target = $region3
  $region8: #{icm_forward.1} parent=0 // loop_exit
    _

</llo_original>
